<compile_context>
chip_gen: v5e
topology: v5e:2x2
jax: 0.10.0
libtpu: 0.0.40
codegen_flags: <defaults>
</compile_context>

<pallas_src>
import functools
import math

import jax
import jax.numpy as jnp
from jax.experimental import pallas as pl
from jax.experimental.pallas import tpu as pltpu

SCALE_WEIGHT = 0.5 ** 0.5
_SUB = 16                      # sublane alignment for the bf16 scratch (16 rows/tile)
_ACT_DTYPE = jnp.bfloat16      # layer-resident activation dtype (residual carry)


def _round_up(x, m):
    return (x + m - 1) // m * m


@functools.lru_cache(maxsize=None)
def _vmem_limit():
    """Generation-aware scoped-VMEM budget (~75% of per-core VMEM)."""
    cap = 64 * 1024 * 1024               # conservative fallback (v7x-sized)
    try:
        cap = int(pltpu.get_tpu_info().vmem_capacity_bytes)
    except Exception:
        pass
    return max(32 * 1024 * 1024, (cap * 3) // 4)


# ----------------------------- Linear kernel --------------------------------
def _linear_kernel(x_ref, w_ref, b_ref, o_ref, acc_ref):
    k = pl.program_id(2)

    @pl.when(k == 0)
    def _():
        acc_ref[...] = jnp.zeros_like(acc_ref)

    acc_ref[...] += jnp.dot(x_ref[...], w_ref[...],
                            preferred_element_type=jnp.float32)

    @pl.when(k == pl.num_programs(2) - 1)
    def _():
        o_ref[...] = (acc_ref[...] + b_ref[...].astype(jnp.float32)).astype(o_ref.dtype)


def _pick_tile(dim, pref, align):
    """Pick (tile, padded_dim) avoiding host-side padding whenever possible."""
    if dim <= pref:
        return dim, dim                              # block == full dim: no pad
    for t in range(pref, align - 1, -align):
        if dim % t == 0:
            return t, dim                            # exact tiling, no pad
    dimp = _round_up(dim, align)                     # minimal pad fallback
    for t in range(pref, align - 1, -align):
        if dimp % t == 0:
            return t, dimp
    return align, dimp


def linear(x, w, b, *, tm=256, tn=1024, tk=1024):
    """x: (M, K), w: (K, N), b: (N,) -> bf16 (M, N), fp32 accumulation."""
    M, K = x.shape
    _, N = w.shape
    TM, Mp = _pick_tile(M, tm, 8)
    TK, Kp = _pick_tile(K, tk, 128)
    TN, Np = _pick_tile(N, tn, 128)

    # bf16 inputs halve HBM/DMA bytes and run the MXU at native rate.
    # TODO(synk): for repeated calls with the same weights, hoist the cast/pad
    # of w out of the per-call path.
    x_bf = x.astype(jnp.bfloat16)
    w_bf = w.astype(jnp.bfloat16)
    if (Mp, Kp) != (M, K):
        x_bf = jnp.pad(x_bf, ((0, Mp - M), (0, Kp - K)))
    if (Kp, Np) != (K, N):
        w_bf = jnp.pad(w_bf, ((0, Kp - K), (0, Np - N)))
    b_f = b.astype(jnp.float32).reshape(1, N)
    if Np != N:
        b_f = jnp.pad(b_f, ((0, 0), (0, Np - N)))

    out = pl.pallas_call(
        _linear_kernel,
        out_shape=jax.ShapeDtypeStruct((Mp, Np), jnp.bfloat16),
        grid=(Mp // TM, Np // TN, Kp // TK),
        in_specs=[
            pl.BlockSpec((TM, TK), lambda i, j, k: (i, k)),
            pl.BlockSpec((TK, TN), lambda i, j, k: (k, j)),
            pl.BlockSpec((1, TN), lambda i, j, k: (0, j)),
        ],
        out_specs=pl.BlockSpec((TM, TN), lambda i, j, k: (i, j)),
        scratch_shapes=[pltpu.VMEM((TM, TN), jnp.float32)],
        compiler_params=pltpu.CompilerParams(
            dimension_semantics=("parallel", "parallel", "arbitrary"),
            vmem_limit_bytes=_vmem_limit()),
    )(x_bf, w_bf, b_f)
    if (Mp, Np) != (M, N):
        out = out[:M, :N]
    return out


# ------------------- Fused stacked gated-conv (all layers) ------------------
def _glu_stack_kernel(x_ref, w_ref, b_ref, o_ref, xscr_ref, *,
                      width, pad, T, H, BB, row_len, pad_left, pad_right,
                      num_layers):
    # x_ref : (BB, T, H)        bf16 — linear output, fetched once per batch block
    # w_ref : (1, width, H, 2H) bf16 — per-layer weight, pipelined over the layer axis
    # b_ref : (1, 1, 2H)        f32
    # o_ref : (BB, H, T)        f32  — written (transposed) only at the last layer
    # xscr  : (BB*row_len, H)   bf16 — layer-resident activations; batch row b lives
    #         at rows [b*row_len + pad_left, +T) with zeroed halo rows around it.
    layer = pl.program_id(1)
    m_out = (BB - 1) * row_len + T        # conv output rows (incl. inter-row gap rows)
    base = pad_left - pad                 # flat row of tap k=0 for output row 0

    @pl.when(layer == 0)
    def _():
        if pad_left > 0:                  # zero only the halo rows, not the interior
            xscr_ref[pl.ds(0, pad_left), :] = jnp.zeros((pad_left, H), _ACT_DTYPE)
        for b in range(BB):
            xscr_ref[pl.ds(b * row_len + pad_left, T), :] = x_ref[b]
            gap = (row_len - T) if b + 1 < BB else pad_right
            if gap > 0:
                xscr_ref[pl.ds(b * row_len + pad_left + T, gap), :] = (
                    jnp.zeros((gap, H), _ACT_DTYPE))

    # `width` accumulated per-tap MXU contractions (no materialized im2col slab).
    acc = None
    center = None
    for k in range(width):
        tap = xscr_ref[pl.ds(base + k, m_out), :]          # bf16 (m_out, H)
        if k == pad:
            center = tap                                   # residual tap
        part = jnp.dot(tap, w_ref[0, k], preferred_element_type=jnp.float32)
        acc = part if acc is None else acc + part
    acc = acc + b_ref[0]                                   # (m_out, 2H) fp32

    out, gate = acc[:, :H], acc[:, H:]
    gate = 0.5 * jnp.tanh(0.5 * gate) + 0.5                # sigmoid via a single tanh
    y = (center.astype(jnp.float32) + out * gate) * SCALE_WEIGHT

    @pl.when(layer + 1 < num_layers)
    def _():
        for b in range(BB):                                # sublane-aligned bf16 carry
            xscr_ref[pl.ds(b * row_len + pad_left, T), :] = (
                y[b * row_len:b * row_len + T, :].astype(_ACT_DTYPE))

    @pl.when(layer + 1 == num_layers)
    def _():
        for b in range(BB):                                # fused (T,H)->(H,T) transpose
            o_ref[b] = y[b * row_len:b * row_len + T, :].T.astype(o_ref.dtype)


def _pick_batch_block(B, T, H, width, row_len, vmem_budget):
    """Largest BB that (a) fits the VMEM budget, (b) divides B, and (c) keeps at
    least two parallel batch blocks when B permits (v7x has 2 TensorCores)."""
    weight_bytes = 2 * (width * H * 2 * H * 2 + 2 * H * 4)      # dbl-buffered w + b
    per_row = H * (2 * row_len        # bf16 resident activations
                   + 4 * T            # double-buffered bf16 input block
                   + 8 * T            # double-buffered f32 output block
                   + 12 * row_len)    # f32 conv accumulator + gated/residual temps
    avail = vmem_budget // 2 - weight_bytes
    bb_cap = max(1, min(8, avail // per_row))
    limit = bb_cap if B < 2 else max(1, min(bb_cap, B // 2))
    bb = 1
    for d in range(1, B + 1):
        if d <= limit and B % d == 0:
            bb = d
    return bb


def gated_conv_stack(x, w_stack, b_stack, *, width):
    """x: (B, T, H); w_stack: (L, width, H, 2H); b_stack: (L, 2H) -> (B, H, T) f32."""
    assert width % 2 == 1, "residual connection requires odd conv width"
    B, T, H = x.shape
    L = w_stack.shape[0]
    pad = width // 2
    pad_left = _round_up(pad, _SUB)
    row_len = pad_left + _round_up(T + pad, _SUB)
    pad_right = row_len - pad_left - T

    vmem_limit = _vmem_limit()
    BB = _pick_batch_block(B, T, H, width, row_len, vmem_limit)
    nblocks = B // BB

    x = x.astype(jnp.bfloat16)
    w4d = w_stack.astype(jnp.bfloat16)                      # (L, width, H, 2H)
    b3d = b_stack.reshape(L, 1, 2 * H).astype(jnp.float32)

    kern = functools.partial(
        _glu_stack_kernel, width=width, pad=pad, T=T, H=H, BB=BB,
        row_len=row_len, pad_left=pad_left, pad_right=pad_right, num_layers=L)

    # TODO(synk): for H >= 1024 or very long T on v7x (64 MiB VMEM), additionally
    # tile the 2H output columns (paired out/gate chunks) and/or the T axis with
    # an in-kernel halo instead of keeping whole (BB*T, 2H) rows resident.
    # TODO(synk): on v5e, pipeline_mode=pl.Buffered(3) on the weight BlockSpec can
    # hide the per-layer weight DMA when BB*T is small.
    return pl.pallas_call(
        kern,
        out_shape=jax.ShapeDtypeStruct((B, H, T), jnp.float32),
        grid=(nblocks, L),
        in_specs=[
            pl.BlockSpec((BB, T, H), lambda bb, l: (bb, 0, 0)),
            pl.BlockSpec((1, width, H, 2 * H), lambda bb, l: (l, 0, 0, 0)),
            pl.BlockSpec((1, 1, 2 * H), lambda bb, l: (l, 0, 0)),
        ],
        out_specs=pl.BlockSpec((BB, H, T), lambda bb, l: (bb, 0, 0)),
        scratch_shapes=[pltpu.VMEM((BB * row_len, H), _ACT_DTYPE)],
        compiler_params=pltpu.CompilerParams(
            dimension_semantics=("parallel", "arbitrary"),
            vmem_limit_bytes=vmem_limit),
    )(x, w4d, b3d)


# ------------------------------ GLU forward ----------------------------------
def glu_forward(emb, params, *, num_layers, width):
    """emb: (B, T, input_size) -> (B, hidden_size, T)  (matches out.squeeze(3))."""
    B, T, _ = emb.shape
    h = linear(emb.reshape(B * T, -1), params["lin_w"], params["lin_b"])   # bf16
    H = h.shape[-1]
    x = h.reshape(B, T, H)
    # Layout transpose to (B, hidden, T) is fused into the last conv layer.
    return gated_conv_stack(x, params["conv_w"], params["conv_b"], width=width)


# --------------------------- Param initialization ---------------------------
def init_params(key, input_size, hidden_size, num_layers, width, dropout):
    ks = jax.random.split(key, 4)
    # nn.Linear default-ish init (uniform), deterministic
    lim = 1.0 / math.sqrt(input_size)
    lin_w = jax.random.uniform(ks[0], (input_size, hidden_size), jnp.float32, -lim, lim)
    lin_b = jax.random.uniform(ks[1], (hidden_size,), jnp.float32, -lim, lim)
    # conv: xavier_uniform with gain (4*(1-dropout))**0.5
    gain = (4.0 * (1.0 - dropout)) ** 0.5
    fan_in = hidden_size * width
    fan_out = 2 * hidden_size * width
    bound = gain * math.sqrt(6.0 / (fan_in + fan_out))
    conv_w = jax.random.uniform(
        ks[2], (num_layers, width, hidden_size, 2 * hidden_size),
        jnp.float32, -bound, bound)
    conv_b = jax.random.uniform(
        ks[3], (num_layers, 2 * hidden_size), jnp.float32,
        -1.0 / math.sqrt(fan_in), 1.0 / math.sqrt(fan_in))
    return {"lin_w": lin_w, "lin_b": lin_b, "conv_w": conv_w, "conv_b": conv_b}


# ------------------------------ Pure-JAX reference ---------------------------
def _reference(emb, params, *, num_layers, width):
    """Mirrors the kernel's compute dtypes (bf16 matmul inputs and bf16 residual
    carry between layers, fp32 accumulation, fp32 final output)."""
    B, T, _ = emb.shape
    h = jnp.dot(emb.reshape(B * T, -1).astype(jnp.bfloat16),
                params["lin_w"].astype(jnp.bfloat16),
                preferred_element_type=jnp.float32) + params["lin_b"]
    H = h.shape[-1]
    x = h.astype(jnp.bfloat16).astype(jnp.float32).reshape(B, T, H)
    pad = width // 2
    y = x
    for l in range(num_layers):
        xp = jnp.pad(x, ((0, 0), (pad, pad), (0, 0))).astype(jnp.bfloat16)
        w = params["conv_w"][l].astype(jnp.bfloat16)            # (width, H, 2H)
        acc = sum(jnp.einsum("bth,ho->bto", xp[:, k:k + T, :], w[k],
                             preferred_element_type=jnp.float32)
                  for k in range(width)) + params["conv_b"][l]
        out, gate = acc[..., :H], acc[..., H:]
        gate = 0.5 * jnp.tanh(0.5 * gate) + 0.5
        y = (x + out * gate) * SCALE_WEIGHT                      # fp32, pre-round
        x = y.astype(jnp.bfloat16).astype(jnp.float32)           # bf16 carry (as kernel)
    return jnp.transpose(y, (0, 2, 1))


if __name__ == "__main__":
    B, T = 2, 16
    input_size, hidden_size = 64, 128
    num_layers, width, dropout = 2, 3, 0.2

    key = jax.random.PRNGKey(0)
    k_emb, k_params = jax.random.split(key)
    emb = jax.random.normal(k_emb, (B, T, input_size), jnp.float32)
    params = init_params(k_params, input_size, hidden_size, num_layers, width, dropout)

    fwd = jax.jit(functools.partial(glu_forward, num_layers=num_layers, width=width))
    out = jax.block_until_ready(fwd(emb, params))

    ref = _reference(emb, params, num_layers=num_layers, width=width)
    assert out.shape == (B, hidden_size, T), out.shape
    err = jnp.max(jnp.abs(out - ref))
    assert jnp.allclose(out, ref, atol=1e-2, rtol=1e-2), f"mismatch vs reference: {err}"

    print("KERNEL_OK")
</pallas_src>

<mosaic_0001>
module attributes {stable_mosaic.version = 11 : i64} {
  func.func @_linear_kernel(%arg0: i32, %arg1: i32, %arg2: i32, %arg3: memref<32x64xbf16, #tpu.memory_space<vmem>>, %arg4: memref<64x128xbf16, #tpu.memory_space<vmem>>, %arg5: memref<1x128xf32, #tpu.memory_space<vmem>>, %arg6: memref<32x128xbf16, #tpu.memory_space<vmem>>, %arg7: memref<32x128xf32, #tpu.memory_space<vmem>>) attributes {dimension_semantics = [#tpu.dimension_semantics<parallel>, #tpu.dimension_semantics<parallel>, #tpu.dimension_semantics<arbitrary>], iteration_bounds = array<i64: 1, 1, 1>, scalar_prefetch = 0 : i64, scratch_operands = 1 : i64, tpu.core_type = #tpu.core_type<tc>, window_params = [{transform_indices = @transform_0, window_bounds = array<i64: 32, 64>}, {transform_indices = @transform_1, window_bounds = array<i64: 64, 128>}, {transform_indices = @transform_2, window_bounds = array<i64: 1, 128>}, {transform_indices = @transform_3, window_bounds = array<i64: 32, 128>}]} {
    %c0_i32 = arith.constant 0 : i32
    %0 = arith.cmpi eq, %arg2, %c0_i32 : i32
    %1 = arith.extui %0 : i1 to i32
    %c0_i32_0 = arith.constant 0 : i32
    %2 = arith.cmpi ne, %1, %c0_i32_0 : i32
    scf.if %2 {
      %cst_10 = arith.constant 0.000000e+00 : f32
      %12 = vector.broadcast %cst_10 : f32 to vector<32x128xf32>
      %c0_11 = arith.constant 0 : index
      %c0_12 = arith.constant 0 : index
      %13 = vector.load %arg7[%c0_11, %c0_12] : memref<32x128xf32, #tpu.memory_space<vmem>>, vector<32x128xf32>
      tpu.vector_store %arg7[%c0_11, %c0_12], %12 {strides = array<i32>} : memref<32x128xf32, #tpu.memory_space<vmem>>, vector<32x128xf32>,
    } else {
    }
    %c0 = arith.constant 0 : index
    %c0_1 = arith.constant 0 : index
    %3 = vector.load %arg7[%c0, %c0_1] : memref<32x128xf32, #tpu.memory_space<vmem>>, vector<32x128xf32>
    %c0_2 = arith.constant 0 : index
    %c0_3 = arith.constant 0 : index
    %4 = vector.load %arg3[%c0_2, %c0_3] : memref<32x64xbf16, #tpu.memory_space<vmem>>, vector<32x64xbf16>
    %c0_4 = arith.constant 0 : index
    %c0_5 = arith.constant 0 : index
    %5 = vector.load %arg4[%c0_4, %c0_5] : memref<64x128xbf16, #tpu.memory_space<vmem>>, vector<64x128xbf16>
    %cst = arith.constant dense<0.000000e+00> : vector<32x128xf32>
    %6 = tpu.matmul %4, %5, %cst {dimension_numbers = #tpu.dot_dimension_numbers<[1], [0], [0], [1], [0, 0, 1, 1], [], []>} : vector<32x64xbf16>, vector<64x128xbf16>, vector<32x128xf32> -> vector<32x128xf32>
    %7 = arith.addf %3, %6 : vector<32x128xf32>
    %c0_6 = arith.constant 0 : index
    %c0_7 = arith.constant 0 : index
    %8 = vector.load %arg7[%c0_6, %c0_7] : memref<32x128xf32, #tpu.memory_space<vmem>>, vector<32x128xf32>
    tpu.vector_store %arg7[%c0_6, %c0_7], %7 {strides = array<i32>} : memref<32x128xf32, #tpu.memory_space<vmem>>, vector<32x128xf32>,
    %c0_i32_8 = arith.constant 0 : i32
    %9 = arith.cmpi eq, %arg2, %c0_i32_8 : i32
    %10 = arith.extui %9 : i1 to i32
    %c0_i32_9 = arith.constant 0 : i32
    %11 = arith.cmpi ne, %10, %c0_i32_9 : i32
    scf.if %11 {
      %c0_10 = arith.constant 0 : index
      %c0_11 = arith.constant 0 : index
      %12 = vector.load %arg7[%c0_10, %c0_11] : memref<32x128xf32, #tpu.memory_space<vmem>>, vector<32x128xf32>
      %c0_12 = arith.constant 0 : index
      %c0_13 = arith.constant 0 : index
      %13 = vector.load %arg5[%c0_12, %c0_13] : memref<1x128xf32, #tpu.memory_space<vmem>>, vector<1x128xf32>
      %14 = vector.broadcast %13 : vector<1x128xf32> to vector<32x128xf32>
      %15 = arith.addf %12, %14 : vector<32x128xf32>
      %16 = arith.truncf %15 : vector<32x128xf32> to vector<32x128xbf16>
      %c0_14 = arith.constant 0 : index
      %c0_15 = arith.constant 0 : index
      %17 = vector.load %arg6[%c0_14, %c0_15] : memref<32x128xbf16, #tpu.memory_space<vmem>>, vector<32x128xbf16>
      tpu.vector_store %arg6[%c0_14, %c0_15], %16 {strides = array<i32>} : memref<32x128xbf16, #tpu.memory_space<vmem>>, vector<32x128xbf16>,
    } else {
    }
    return
  }
  func.func @transform_0(%arg0: i32, %arg1: i32, %arg2: i32) -> (i32, i32) {
    %c0_i32 = arith.constant 0 : i32
    return %arg0, %arg2 : i32, i32
  }
  func.func @transform_1(%arg0: i32, %arg1: i32, %arg2: i32) -> (i32, i32) {
    %c0_i32 = arith.constant 0 : i32
    return %arg2, %arg1 : i32, i32
  }
  func.func @transform_2(%arg0: i32, %arg1: i32, %arg2: i32) -> (i32, i32) {
    %c0_i32 = arith.constant 0 : i32
    %c0_i32_0 = arith.constant 0 : i32
    return %c0_i32, %arg1 : i32, i32
  }
  func.func @transform_3(%arg0: i32, %arg1: i32, %arg2: i32) -> (i32, i32) {
    %c0_i32 = arith.constant 0 : i32
    return %arg0, %arg1 : i32, i32
  }
}

module attributes {stable_mosaic.version = 11 : i64} {
  func.func @_glu_stack_kernel(%arg0: i32, %arg1: i32, %arg2: memref<1x16x128xbf16, #tpu.memory_space<vmem>>, %arg3: memref<1x3x128x256xbf16, #tpu.memory_space<vmem>>, %arg4: memref<1x1x256xf32, #tpu.memory_space<vmem>>, %arg5: memref<1x128x16xf32, #tpu.memory_space<vmem>>, %arg6: memref<48x128xbf16, #tpu.memory_space<vmem>>) attributes {dimension_semantics = [#tpu.dimension_semantics<parallel>, #tpu.dimension_semantics<arbitrary>], iteration_bounds = array<i64: 2, 2>, scalar_prefetch = 0 : i64, scratch_operands = 1 : i64, tpu.core_type = #tpu.core_type<tc>, window_params = [{transform_indices = @transform_0, window_bounds = array<i64: 1, 16, 128>}, {transform_indices = @transform_1, window_bounds = array<i64: 1, 3, 128, 256>}, {transform_indices = @transform_2, window_bounds = array<i64: 1, 1, 256>}, {transform_indices = @transform_3, window_bounds = array<i64: 1, 128, 16>}]} {
    %c0_i32 = arith.constant 0 : i32
    %0 = arith.cmpi eq, %arg1, %c0_i32 : i32
    %1 = arith.extui %0 : i1 to i32
    %c0_i32_0 = arith.constant 0 : i32
    %2 = arith.cmpi ne, %1, %c0_i32_0 : i32
    scf.if %2 {
      %cst_26 = arith.constant 0.000000e+00 : bf16
      %43 = vector.broadcast %cst_26 : bf16 to vector<16x128xbf16>
      %c0_27 = arith.constant 0 : index
      %c0_28 = arith.constant 0 : index
      %44 = vector.load %arg6[%c0_27, %c0_28] : memref<48x128xbf16, #tpu.memory_space<vmem>>, vector<16x128xbf16>
      tpu.vector_store %arg6[%c0_27, %c0_28], %43 {strides = array<i32>} : memref<48x128xbf16, #tpu.memory_space<vmem>>, vector<16x128xbf16>,
      %c0_29 = arith.constant 0 : index
      %c0_30 = arith.constant 0 : index
      %c0_31 = arith.constant 0 : index
      %45 = vector.load %arg2[%c0_29, %c0_30, %c0_31] : memref<1x16x128xbf16, #tpu.memory_space<vmem>>, vector<1x16x128xbf16>
      %46 = vector.shape_cast %45 : vector<1x16x128xbf16> to vector<16x128xbf16>
      %c16_32 = arith.constant 16 : index
      %c0_33 = arith.constant 0 : index
      %47 = vector.load %arg6[%c16_32, %c0_33] : memref<48x128xbf16, #tpu.memory_space<vmem>>, vector<16x128xbf16>
      tpu.vector_store %arg6[%c16_32, %c0_33], %46 {strides = array<i32>} : memref<48x128xbf16, #tpu.memory_space<vmem>>, vector<16x128xbf16>,
      %cst_34 = arith.constant 0.000000e+00 : bf16
      %48 = vector.broadcast %cst_34 : bf16 to vector<16x128xbf16>
      %c32 = arith.constant 32 : index
      %c0_35 = arith.constant 0 : index
      %49 = vector.load %arg6[%c32, %c0_35] : memref<48x128xbf16, #tpu.memory_space<vmem>>, vector<16x128xbf16>
      tpu.vector_store %arg6[%c32, %c0_35], %48 {strides = array<i32>} : memref<48x128xbf16, #tpu.memory_space<vmem>>, vector<16x128xbf16>,
    } else {
    }
    %c15 = arith.constant 15 : index
    %c0 = arith.constant 0 : index
    %3 = vector.load %arg6[%c15, %c0] : memref<48x128xbf16, #tpu.memory_space<vmem>>, vector<16x128xbf16>
    %c0_1 = arith.constant 0 : index
    %c0_2 = arith.constant 0 : index
    %c0_3 = arith.constant 0 : index
    %c0_4 = arith.constant 0 : index
    %4 = vector.load %arg3[%c0_1, %c0_2, %c0_3, %c0_4] : memref<1x3x128x256xbf16, #tpu.memory_space<vmem>>, vector<1x1x128x256xbf16>
    %5 = vector.shape_cast %4 : vector<1x1x128x256xbf16> to vector<128x256xbf16>
    %cst = arith.constant dense<0.000000e+00> : vector<16x256xf32>
    %6 = tpu.matmul %3, %5, %cst {dimension_numbers = #tpu.dot_dimension_numbers<[1], [0], [0], [1], [0, 0, 1, 1], [], []>} : vector<16x128xbf16>, vector<128x256xbf16>, vector<16x256xf32> -> vector<16x256xf32>
    %c16 = arith.constant 16 : index
    %c0_5 = arith.constant 0 : index
    %7 = vector.load %arg6[%c16, %c0_5] : memref<48x128xbf16, #tpu.memory_space<vmem>>, vector<16x128xbf16>
    %c0_6 = arith.constant 0 : index
    %c1 = arith.constant 1 : index
    %c0_7 = arith.constant 0 : index
    %c0_8 = arith.constant 0 : index
    %8 = vector.load %arg3[%c0_6, %c1, %c0_7, %c0_8] : memref<1x3x128x256xbf16, #tpu.memory_space<vmem>>, vector<1x1x128x256xbf16>
    %9 = vector.shape_cast %8 : vector<1x1x128x256xbf16> to vector<128x256xbf16>
    %cst_9 = arith.constant dense<0.000000e+00> : vector<16x256xf32>
    %10 = tpu.matmul %7, %9, %cst_9 {dimension_numbers = #tpu.dot_dimension_numbers<[1], [0], [0], [1], [0, 0, 1, 1], [], []>} : vector<16x128xbf16>, vector<128x256xbf16>, vector<16x256xf32> -> vector<16x256xf32>
    %11 = arith.addf %6, %10 : vector<16x256xf32>
    %c17 = arith.constant 17 : index
    %c0_10 = arith.constant 0 : index
    %12 = vector.load %arg6[%c17, %c0_10] : memref<48x128xbf16, #tpu.memory_space<vmem>>, vector<16x128xbf16>
    %c0_11 = arith.constant 0 : index
    %c2 = arith.constant 2 : index
    %c0_12 = arith.constant 0 : index
    %c0_13 = arith.constant 0 : index
    %13 = vector.load %arg3[%c0_11, %c2, %c0_12, %c0_13] : memref<1x3x128x256xbf16, #tpu.memory_space<vmem>>, vector<1x1x128x256xbf16>
    %14 = vector.shape_cast %13 : vector<1x1x128x256xbf16> to vector<128x256xbf16>
    %cst_14 = arith.constant dense<0.000000e+00> : vector<16x256xf32>
    %15 = tpu.matmul %12, %14, %cst_14 {dimension_numbers = #tpu.dot_dimension_numbers<[1], [0], [0], [1], [0, 0, 1, 1], [], []>} : vector<16x128xbf16>, vector<128x256xbf16>, vector<16x256xf32> -> vector<16x256xf32>
    %16 = arith.addf %11, %15 : vector<16x256xf32>
    %c0_15 = arith.constant 0 : index
    %c0_16 = arith.constant 0 : index
    %c0_17 = arith.constant 0 : index
    %17 = vector.load %arg4[%c0_15, %c0_16, %c0_17] : memref<1x1x256xf32, #tpu.memory_space<vmem>>, vector<1x1x256xf32>
    %18 = vector.shape_cast %17 : vector<1x1x256xf32> to vector<1x256xf32>
    %19 = vector.broadcast %18 : vector<1x256xf32> to vector<16x256xf32>
    %20 = arith.addf %16, %19 : vector<16x256xf32>
    %21 = vector.extract_strided_slice %20 {offsets = [0, 0], sizes = [16, 128], strides = [1, 1]} : vector<16x256xf32> to vector<16x128xf32>
    %22 = vector.extract_strided_slice %20 {offsets = [0, 128], sizes = [16, 128], strides = [1, 1]} : vector<16x256xf32> to vector<16x128xf32>
    %cst_18 = arith.constant 5.000000e-01 : f32
    %23 = vector.broadcast %cst_18 : f32 to vector<16x128xf32>
    %24 = arith.mulf %23, %22 : vector<16x128xf32>
    %25 = math.tanh %24 : vector<16x128xf32>
    %cst_19 = arith.constant 5.000000e-01 : f32
    %26 = vector.broadcast %cst_19 : f32 to vector<16x128xf32>
    %27 = arith.mulf %26, %25 : vector<16x128xf32>
    %cst_20 = arith.constant 5.000000e-01 : f32
    %28 = vector.broadcast %cst_20 : f32 to vector<16x128xf32>
    %29 = arith.addf %27, %28 : vector<16x128xf32>
    %30 = arith.extf %7 : vector<16x128xbf16> to vector<16x128xf32>
    %31 = arith.mulf %21, %29 : vector<16x128xf32>
    %32 = arith.addf %30, %31 : vector<16x128xf32>
    %cst_21 = arith.constant 0.707106769 : f32
    %33 = vector.broadcast %cst_21 : f32 to vector<16x128xf32>
    %34 = arith.mulf %32, %33 : vector<16x128xf32>
    %c1_i32 = arith.constant 1 : i32
    %35 = arith.addi %arg1, %c1_i32 : i32
    %c2_i32 = arith.constant 2 : i32
    %36 = arith.cmpi slt, %35, %c2_i32 : i32
    %37 = arith.extui %36 : i1 to i32
    %c0_i32_22 = arith.constant 0 : i32
    %38 = arith.cmpi ne, %37, %c0_i32_22 : i32
    scf.if %38 {
      %43 = arith.truncf %34 : vector<16x128xf32> to vector<16x128xbf16>
      %c16_26 = arith.constant 16 : index
      %c0_27 = arith.constant 0 : index
      %44 = vector.load %arg6[%c16_26, %c0_27] : memref<48x128xbf16, #tpu.memory_space<vmem>>, vector<16x128xbf16>
      tpu.vector_store %arg6[%c16_26, %c0_27], %43 {strides = array<i32>} : memref<48x128xbf16, #tpu.memory_space<vmem>>, vector<16x128xbf16>,
    } else {
    }
    %c1_i32_23 = arith.constant 1 : i32
    %39 = arith.addi %arg1, %c1_i32_23 : i32
    %c2_i32_24 = arith.constant 2 : i32
    %40 = arith.cmpi eq, %39, %c2_i32_24 : i32
    %41 = arith.extui %40 : i1 to i32
    %c0_i32_25 = arith.constant 0 : i32
    %42 = arith.cmpi ne, %41, %c0_i32_25 : i32
    scf.if %42 {
      %43 = tpu.transpose %34, [1, 0] : vector<16x128xf32> -> vector<128x16xf32>
      %c0_26 = arith.constant 0 : index
      %c0_27 = arith.constant 0 : index
      %c0_28 = arith.constant 0 : index
      %44 = vector.load %arg5[%c0_26, %c0_27, %c0_28] : memref<1x128x16xf32, #tpu.memory_space<vmem>>, vector<1x128x16xf32>
      %45 = vector.shape_cast %44 : vector<1x128x16xf32> to vector<128x16xf32>
      %46 = vector.shape_cast %43 : vector<128x16xf32> to vector<1x128x16xf32>
      tpu.vector_store %arg5[%c0_26, %c0_27, %c0_28], %46 {strides = array<i32>} : memref<1x128x16xf32, #tpu.memory_space<vmem>>, vector<1x128x16xf32>,
    } else {
    }
    return
  }
  func.func @transform_0(%arg0: i32, %arg1: i32) -> (i32, i32, i32) {
    %c0_i32 = arith.constant 0 : i32
    %c0_i32_0 = arith.constant 0 : i32
    %c0_i32_1 = arith.constant 0 : i32
    return %arg0, %c0_i32, %c0_i32_0 : i32, i32, i32
  }
  func.func @transform_1(%arg0: i32, %arg1: i32) -> (i32, i32, i32, i32) {
    %c0_i32 = arith.constant 0 : i32
    %c0_i32_0 = arith.constant 0 : i32
    %c0_i32_1 = arith.constant 0 : i32
    %c0_i32_2 = arith.constant 0 : i32
    return %arg1, %c0_i32, %c0_i32_0, %c0_i32_1 : i32, i32, i32, i32
  }
  func.func @transform_2(%arg0: i32, %arg1: i32) -> (i32, i32, i32) {
    %c0_i32 = arith.constant 0 : i32
    %c0_i32_0 = arith.constant 0 : i32
    %c0_i32_1 = arith.constant 0 : i32
    return %arg1, %c0_i32, %c0_i32_0 : i32, i32, i32
  }
  func.func @transform_3(%arg0: i32, %arg1: i32) -> (i32, i32, i32) {
    %c0_i32 = arith.constant 0 : i32
    %c0_i32_0 = arith.constant 0 : i32
    %c0_i32_1 = arith.constant 0 : i32
    return %arg0, %c0_i32, %c0_i32_0 : i32, i32, i32
  }
}

</mosaic_0001>

<llo_original>
// kernel: glu_forward.2
$region0: #{glu_forward.2}
  #allocation0 [shape = 'u32[]', space=smem, size = 0x4, offset = 0x4, fixed_abs, tag = 'smem constant byte address 0x4 - core index']
  #allocation1 [shape = 'u32[72,128]{1,0:T(1,128)}', space=vmem, size = 0x9000, scoped, tag = 'internal scratch']
  #allocation2 [shape = 'f32[32,128]{1,0:T(8,128)}', space=vmem, size = 0x4000, scoped, tag = 'scratch operand']
  %s0 = inlined_call_operand.vmem [shape: bf16[32,64], index: 0, kind: input, shape index: {}]
  %s1 = inlined_call_operand.vmem [shape: bf16[64,128], index: 1, kind: input, shape index: {}]
  %s2 = inlined_call_operand.vmem [shape: f32[1,128], index: 2, kind: input, shape index: {}]
  %s3 = inlined_call_operand.vmem [shape: bf16[32,128], index: 3, kind: output, shape index: {}]
  %s4 = sld [smem:[#allocation0]]
  $region30: #{glu_forward.2} parent=0
    _
  %s6 = ssub.s32 1, %s4
  %s7 = scalar_select 0, %s6, %s4
  // Predicated region
  $region2: #{glu_forward.2} parent=0 // pred_check
    _
  $region3: #{glu_forward.2} parent=0 // pred_check_branch
    %9 = sbr.rel (0) target = $region5
  $region4: #{glu_forward.2} parent=0 // pred_region
    _
  $region5: #{glu_forward.2} parent=0 // pred_fallthru
    _
  // Predicated region
  $region6: #{glu_forward.2} parent=0 // pred_check
    _
  $region7: #{glu_forward.2} parent=0 // pred_check_branch
    %11 = sbr.rel (0) target = $region9
  $region8: #{glu_forward.2} parent=0 // pred_region
    _
  $region9: #{glu_forward.2} parent=0 // pred_fallthru
    _
  // Predicated region
  $region10: #{glu_forward.2} parent=0 // pred_check
    _
  $region11: #{glu_forward.2} parent=0 // pred_check_branch
    %13 = sbr.rel (0) target = $region13
  $region12: #{glu_forward.2} parent=0 // pred_region
    _
  $region13: #{glu_forward.2} parent=0 // pred_fallthru
    _
  %p15 = scmp.eq.s32.totalorder 0, 0
  // Predicated region
  $region14: #{glu_forward.2} parent=0 // pred_check
    %p16 = pneg %p15
  $region15: #{glu_forward.2} parent=0 // pred_check_branch
    %18 = sbr.rel (%p16) target = $region17
  $region16: #{glu_forward.2} parent=0 // pred_region
    %19 = vst [vmem:[#allocation2] sm:$0xff] 0.0
    %20 = vst [vmem:[#allocation2 + $0x8] sm:$0xff] 0.0
    %21 = vst [vmem:[#allocation2 + $0x10] sm:$0xff] 0.0
    %22 = vst [vmem:[#allocation2 + $0x18] sm:$0xff] 0.0
  $region17: #{glu_forward.2} parent=0 // pred_fallthru
    _
  %v23 = vld [vmem:[#allocation2] sm:$0xff]
  %v24 = vld [vmem:[#allocation2 + $0x8] sm:$0xff]
  %v25 = vld [vmem:[#allocation2 + $0x10] sm:$0xff]
  %v26 = vld [vmem:[#allocation2 + $0x18] sm:$0xff]
  %v27 = vld [vmem:[%s0] sm:$0xf]
  %v28 = vld [vmem:[%s0 + $0x4] sm:$0xf]
  %v29 = vld [vmem:[%s0 + $0x8] sm:$0xf]
  %v30 = vld [vmem:[%s0 + $0xc] sm:$0xf]
  %v31 = vld [vmem:[%s1] sm:$0xf]
  %v32 = vld [vmem:[%s1 + $0x4] sm:$0xf]
  %v33 = vld [vmem:[%s1 + $0x8] sm:$0xf]
  %v34 = vld [vmem:[%s1 + $0xc] sm:$0xf]
  %v35 = vld [vmem:[%s1 + $0x10] sm:$0xf]
  %v36 = vld [vmem:[%s1 + $0x14] sm:$0xf]
  %v37 = vld [vmem:[%s1 + $0x18] sm:$0xf]
  %v38 = vld [vmem:[%s1 + $0x1c] sm:$0xf]
  %v43 = vunpack.c.l.b16 %v27
  %v44 = vunpack.c.l.b16 %v28
  %v45 = vunpack.c.l.b16 %v29
  %v46 = vunpack.c.l.b16 %v30
  %v47 = vpack.c.b16 %v44, %v43
  %v48 = vpack.c.b16 %v46, %v45
  %v57 = vunpack.c.l.b16 %v31
  %v58 = vunpack.c.l.b16 %v32
  %v59 = vunpack.c.l.b16 %v33
  %v60 = vunpack.c.l.b16 %v34
  %v61 = vunpack.c.l.b16 %v35
  %v62 = vunpack.c.l.b16 %v36
  %v63 = vunpack.c.l.b16 %v37
  %v64 = vunpack.c.l.b16 %v38
  %v65 = vpack.c.b16 %v58, %v57
  %v66 = vpack.c.b16 %v60, %v59
  %v67 = vpack.c.b16 %v62, %v61
  %v68 = vpack.c.b16 %v64, %v63
  %vm73 = vcmask 523264
  %v75 = vsel %vm73, %v47, 0
  %v78 = vsel %vm73, %v48, 0
  %80 = vmatpush.bf16.msra.mxu0 0
  %81 = vmatpush.bf16.msra.mxu0 0
  %82 = vmatpush.bf16.msra.mxu0 0
  %83 = vmatpush.bf16.msra.mxu0 0
  %84 = vmatpush.bf16.msra.mxu0 %v68
  %85 = vmatpush.bf16.msra.mxu0 %v67
  %86 = vmatpush.bf16.msra.mxu0 %v66
  %87 = vmatpush.bf16.msra.mxu0 %v65
  %88 = vmatmul.bf16.gmra.mxu0 %v75
  %v89 = vpop.f32.mrf.mxu0
  %v90 = vadd.f32 0.0, %v89
  %v91 = vpop.f32.mrf.mxu0
  %v92 = vadd.f32 0.0, %v91
  %93 = vmatmul.bf16.gmra.mxu0 %v78
  %v94 = vpop.f32.mrf.mxu0
  %v95 = vadd.f32 0.0, %v94
  %v96 = vpop.f32.mrf.mxu0
  %v97 = vadd.f32 0.0, %v96
  %98 = vdwg.mxu0
  %v99 = vadd.f32 %v23, %v90
  %v100 = vadd.f32 %v24, %v92
  %v101 = vadd.f32 %v25, %v95
  %v102 = vadd.f32 %v26, %v97
  %103 = vst [vmem:[#allocation2] sm:$0xff] %v99
  %104 = vst [vmem:[#allocation2 + $0x8] sm:$0xff] %v100
  %105 = vst [vmem:[#allocation2 + $0x10] sm:$0xff] %v101
  %106 = vst [vmem:[#allocation2 + $0x18] sm:$0xff] %v102
  // Predicated region
  $region18: #{glu_forward.2} parent=0 // pred_check
    %p107 = pneg %p15
  $region19: #{glu_forward.2} parent=0 // pred_check_branch
    %109 = sbr.rel (%p107) target = $region21
  $region20: #{glu_forward.2} parent=0 // pred_region
    %v110 = vld [vmem:[#allocation2] sm:$0xff]
    %v111 = vld [vmem:[#allocation2 + $0x8] sm:$0xff]
    %v112 = vld [vmem:[#allocation2 + $0x10] sm:$0xff]
    %v113 = vld [vmem:[#allocation2 + $0x18] sm:$0xff]
    %v114 = vld [vmem:[%s2] sm:$0x1]
    %v116 = vperm.slane %v114, 0
    %v118 = vadd.f32 %v110, %v116
    %v119 = vadd.f32 %v111, %v116
    %v120 = vadd.f32 %v112, %v116
    %v121 = vadd.f32 %v113, %v116
    %v122 = vpack.c.bf16 %v118, %v118
    %v123 = vpack.c.bf16 %v119, %v119
    %v124 = vpack.c.bf16 %v120, %v120
    %v125 = vpack.c.bf16 %v121, %v121
    %126 = vst [vmem:[%s3] sm:$0xf] %v122
    %127 = vst [vmem:[%s3 + $0x4] sm:$0xf] %v123
    %128 = vst [vmem:[%s3 + $0x8] sm:$0xf] %v124
    %129 = vst [vmem:[%s3 + $0xc] sm:$0xf] %v125
  $region21: #{glu_forward.2} parent=0 // pred_fallthru
    _
  // Predicated region
  $region22: #{glu_forward.2} parent=0 // pred_check
    _
  $region23: #{glu_forward.2} parent=0 // pred_check_branch
    %131 = sbr.rel (0) target = $region25
  $region24: #{glu_forward.2} parent=0 // pred_region
    _
  $region25: #{glu_forward.2} parent=0 // pred_fallthru
    _
  // Predicated region
  $region26: #{glu_forward.2} parent=0 // pred_check
    _
  $region27: #{glu_forward.2} parent=0 // pred_check_branch
    %133 = sbr.rel (0) target = $region29
  $region28: #{glu_forward.2} parent=0 // pred_region
    _
  $region29: #{glu_forward.2} parent=0 // pred_fallthru
    _

// kernel: glu_forward.3
$region0: #{glu_forward.3}
  #allocation0 [shape = 'u32[]', space=smem, size = 0x4, offset = 0x4, fixed_abs, tag = 'smem constant byte address 0x4 - core index']
  #allocation1 [shape = 'u32[72,128]{1,0:T(1,128)}', space=vmem, size = 0x9000, scoped, tag = 'internal scratch']
  #allocation2 [shape = 'bf16[48,128]{1,0:T(8,128)(2,1)}', space=vmem, size = 0x3000, scoped, tag = 'scratch operand']
  %s0 = inlined_call_operand.vmem [shape: bf16[2,16,128], index: 0, kind: input, shape index: {}]
  %s1 = inlined_call_operand.vmem [shape: bf16[2,3,128,256], index: 1, kind: input, shape index: {}]
  %s2 = inlined_call_operand.vmem [shape: f32[2,1,256], index: 2, kind: input, shape index: {}]
  %s3 = inlined_call_operand.vmem [shape: f32[2,128,16], index: 3, kind: output, shape index: {}]
  %s4 = sld [smem:[#allocation0]]
  $region57: #{glu_forward.3} parent=0
    _
  %s6 = ssub.s32 1, %s4
  %s7 = scalar_select 0, %s6, %s4
  loop: start=0, step=1, limit=6
  $region2: #{glu_forward.3} parent=0 // loop_pre_header
    _
  $region3: #{glu_forward.3} parent=0 // loop_header
    %s9 = sphi 0, %s13
    %p10 = scmp.ge.s32.totalorder %s9, 6
    %s16 = sphi 0, %s28
    %s17 = sphi 0, %s24
    %s18 = sphi 0, %s16
    %s19 = sphi 0, %s17
    %s20 = sphi 0, %s18
    %s21 = sphi 0, %s19
    %s31 = sphi 0, %s33
    %s34 = sphi 0, %s31
    %s35 = sphi 0, %s34
    %s51 = sphi 0, %s35
    %s57 = sphi 0, %s59
    %s60 = sphi 0, %s57
    %s61 = sphi 0, %s60
    %s77 = sphi 0, %s61
    %s83 = sphi 0, %s85
    %s86 = sphi 0, %s83
    %s87 = sphi 0, %s86
    %s103 = sphi 0, %s87
    %s109 = sphi 0, %s111
    %s112 = sphi 0, %s109
    %s113 = sphi 0, %s112
    %s129 = sphi 0, %s113
  $region4: #{glu_forward.3} parent=0 // loop_header_branch
    %12 = sbr.rel (%p10) target = $region8
  $region5: #{glu_forward.3} parent=0 // loop_body
    %s14 = ssub.s32 %s9, 1
    %s15 = ssub.s32 %s9, 2
    %s22 = sadd.s32 1, %s17
    %p23 = scmp.ge.s32.totalorder %s22, 2
    %s24 = scalar_select %p23, 0, %s22
    %s25 = sadd.s32 1, %s16
    %s26 = scalar_select %p23, %s25, %s16
    %p27 = scmp.ge.s32.totalorder %s26, 2
    %s28 = scalar_select %p27, 0, %s26
    %s29 = ssub.s32 %s16, %s28
    %p30 = scmp.eq.s32.totalorder %s29, 0
    %s32 = sadd.s32 %s31, 1
    %s33 = scalar_select %p30, %s31, %s32
    %p36 = pneg %p30
    %p37 = scmp.eq.s32.totalorder %s9, 3
    %p38 = por %p36, %p37
    %p39 = scmp.ne.s32.totalorder %s31, %s34
    %p40 = scmp.eq.s32.totalorder %s9, 0
    %p41 = por %p39, %p40
    %p42 = scmp.ne.s32.totalorder %s31, %s34
    %p43 = scmp.eq.s32.totalorder %s14, 3
    %p44 = por %p42, %p43
    %p45 = scmp.ne.s32.totalorder %s34, %s35
    %p46 = scmp.eq.s32.totalorder %s14, 0
    %p47 = por %p45, %p46
    %p48 = scmp.ne.s32.totalorder %s34, %s35
    %p49 = scmp.eq.s32.totalorder %s15, 3
    %p50 = por %p48, %p49
    %p52 = scmp.ne.s32.totalorder %s35, %s51
    %p53 = scmp.eq.s32.totalorder %s15, 0
    %p54 = por %p52, %p53
    %s55 = ssub.s32 %s17, %s24
    %p56 = scmp.eq.s32.totalorder %s55, 0
    %s58 = sadd.s32 %s57, 1
    %s59 = scalar_select %p56, %s57, %s58
    %p62 = pneg %p56
    %p63 = scmp.eq.s32.totalorder %s9, 3
    %p64 = por %p62, %p63
    %p65 = scmp.ne.s32.totalorder %s57, %s60
    %p66 = scmp.eq.s32.totalorder %s9, 0
    %p67 = por %p65, %p66
    %p68 = scmp.ne.s32.totalorder %s57, %s60
    %p69 = scmp.eq.s32.totalorder %s14, 3
    %p70 = por %p68, %p69
    %p71 = scmp.ne.s32.totalorder %s60, %s61
    %p72 = scmp.eq.s32.totalorder %s14, 0
    %p73 = por %p71, %p72
    %p74 = scmp.ne.s32.totalorder %s60, %s61
    %p75 = scmp.eq.s32.totalorder %s15, 3
    %p76 = por %p74, %p75
    %p78 = scmp.ne.s32.totalorder %s61, %s77
    %p79 = scmp.eq.s32.totalorder %s15, 0
    %p80 = por %p78, %p79
    %s81 = ssub.s32 %s17, %s24
    %p82 = scmp.eq.s32.totalorder %s81, 0
    %s84 = sadd.s32 %s83, 1
    %s85 = scalar_select %p82, %s83, %s84
    %p88 = pneg %p82
    %p89 = scmp.eq.s32.totalorder %s9, 3
    %p90 = por %p88, %p89
    %p91 = scmp.ne.s32.totalorder %s83, %s86
    %p92 = scmp.eq.s32.totalorder %s9, 0
    %p93 = por %p91, %p92
    %p94 = scmp.ne.s32.totalorder %s83, %s86
    %p95 = scmp.eq.s32.totalorder %s14, 3
    %p96 = por %p94, %p95
    %p97 = scmp.ne.s32.totalorder %s86, %s87
    %p98 = scmp.eq.s32.totalorder %s14, 0
    %p99 = por %p97, %p98
    %p100 = scmp.ne.s32.totalorder %s86, %s87
    %p101 = scmp.eq.s32.totalorder %s15, 3
    %p102 = por %p100, %p101
    %p104 = scmp.ne.s32.totalorder %s87, %s103
    %p105 = scmp.eq.s32.totalorder %s15, 0
    %p106 = por %p104, %p105
    %s107 = ssub.s32 %s16, %s28
    %p108 = scmp.eq.s32.totalorder %s107, 0
    %s110 = sadd.s32 %s109, 1
    %s111 = scalar_select %p108, %s109, %s110
    %p114 = pneg %p108
    %p115 = scmp.eq.s32.totalorder %s9, 3
    %p116 = por %p114, %p115
    %p117 = scmp.ne.s32.totalorder %s109, %s112
    %p118 = scmp.eq.s32.totalorder %s9, 0
    %p119 = por %p117, %p118
    %p120 = scmp.ne.s32.totalorder %s109, %s112
    %p121 = scmp.eq.s32.totalorder %s14, 3
    %p122 = por %p120, %p121
    %p123 = scmp.ne.s32.totalorder %s112, %s113
    %p124 = scmp.eq.s32.totalorder %s14, 0
    %p125 = por %p123, %p124
    %p126 = scmp.ne.s32.totalorder %s112, %s113
    %p127 = scmp.eq.s32.totalorder %s15, 3
    %p128 = por %p126, %p127
    %p130 = scmp.ne.s32.totalorder %s113, %s129
    %p131 = scmp.eq.s32.totalorder %s15, 0
    %p132 = por %p130, %p131
    %p133 = scmp.le.s32.totalorder 1, %s9
    %p134 = scmp.lt.s32.totalorder %s9, 5
    %p135 = pnand %p133, %p134
    %p136 = pneg %p135
    // Predicated region
    $region9: #{glu_forward.3} parent=5 // pred_check
      _
    $region10: #{glu_forward.3} parent=5 // pred_check_branch
      %138 = sbr.rel (%p135) target = $region12
    $region11: #{glu_forward.3} parent=5 // pred_region
      %s139 = ssub.s32 %s9, 1
    $region12: #{glu_forward.3} parent=5 // pred_fallthru
      _
    %p140 = scmp.lt.s32.totalorder %s9, 4
    // Predicated region
    $region13: #{glu_forward.3} parent=5 // pred_check
      %p141 = pneg %p140
    $region14: #{glu_forward.3} parent=5 // pred_check_branch
      %143 = sbr.rel (%p141) target = $region16
    $region15: #{glu_forward.3} parent=5 // pred_region
      // Predicated region
      $region17: #{glu_forward.3} parent=15 // pred_check
        %p144 = pneg %p41
      $region18: #{glu_forward.3} parent=15 // pred_check_branch
        %146 = sbr.rel (%p144) target = $region20
      $region19: #{glu_forward.3} parent=15 // pred_region
        %p147 = scmp.lt.s32.totalorder %s16, 1
        %s148 = scalar_select %p147, %s16, 1
        %s149 = smul.addr %s148, 2
        %s150 = smul.addr %s149, 4
        %s151 = scalar_lea.vmem %s0, %s150
      $region20: #{glu_forward.3} parent=15 // pred_fallthru
        _
      // Predicated region
      $region21: #{glu_forward.3} parent=15 // pred_check
        %p152 = pneg %p67
      $region22: #{glu_forward.3} parent=15 // pred_check_branch
        %154 = sbr.rel (%p152) target = $region24
      $region23: #{glu_forward.3} parent=15 // pred_region
        %p155 = scmp.lt.s32.totalorder %s17, 1
        %s156 = scalar_select %p155, %s17, 1
        %s157 = smul.addr %s156, 96
        %s158 = smul.addr %s157, 4
        %s159 = scalar_lea.vmem %s1, %s158
      $region24: #{glu_forward.3} parent=15 // pred_fallthru
        _
      // Predicated region
      $region25: #{glu_forward.3} parent=15 // pred_check
        %p160 = pneg %p93
      $region26: #{glu_forward.3} parent=15 // pred_check_branch
        %162 = sbr.rel (%p160) target = $region28
      $region27: #{glu_forward.3} parent=15 // pred_region
        %p163 = scmp.lt.s32.totalorder %s17, 1
        %s164 = scalar_select %p163, %s17, 1
        %s165 = smul.addr %s164, 2
        %s166 = scalar_lea.vmem %s2, %s165
      $region28: #{glu_forward.3} parent=15 // pred_fallthru
        _
    $region16: #{glu_forward.3} parent=5 // pred_fallthru
      _
    %p167 = scmp.le.s32.totalorder 1, %s9
    %p168 = scmp.lt.s32.totalorder %s9, 5
    %p169 = pnand %p167, %p168
    %p170 = pneg %p169
    // Predicated region
    $region29: #{glu_forward.3} parent=5 // pred_check
      _
    $region30: #{glu_forward.3} parent=5 // pred_check_branch
      %172 = sbr.rel (%p169) target = $region32
    $region31: #{glu_forward.3} parent=5 // pred_region
      %s173 = ssub.s32 %s9, 1
      %p174 = scmp.lt.s32.totalorder %s18, 1
      %s175 = scalar_select %p174, %s18, 1
      %s176 = smul.addr %s175, 2
      %s177 = smul.addr %s176, 4
      %s178 = scalar_lea.vmem %s0, %s177
      %p179 = pneg %p47
      %p180 = pneg %p44
      %p181 = scmp.lt.s32.totalorder %s19, 1
      %s182 = scalar_select %p181, %s19, 1
      %s183 = smul.addr %s182, 96
      %s184 = smul.addr %s183, 4
      %s185 = scalar_lea.vmem %s1, %s184
      %p186 = pneg %p73
      %p187 = pneg %p70
      %p188 = scmp.lt.s32.totalorder %s19, 1
      %s189 = scalar_select %p188, %s19, 1
      %s190 = smul.addr %s189, 2
      %s191 = scalar_lea.vmem %s2, %s190
      %p192 = pneg %p99
      %p193 = pneg %p96
      %p194 = pneg %p125
      %p195 = pneg %p122
      %p196 = scmp.lt.s32.totalorder %s18, 1
      %s197 = scalar_select %p196, %s18, 1
      %s198 = smul.addr %s197, 16
      %s199 = smul.addr %s198, 8
      %s200 = scalar_lea.vmem %s3, %s199
      %p201 = scmp.lt.s32.totalorder %s18, 1
      %s202 = scalar_select %p201, %s18, 1
      %s203 = smul.addr %s202, 2
      %s204 = smul.addr %s203, 4
      %s205 = scalar_lea.vmem %s0, %s204
      %p206 = scmp.lt.s32.totalorder %s19, 1
      %s207 = scalar_select %p206, %s19, 1
      %s208 = smul.addr %s207, 96
      %s209 = smul.addr %s208, 4
      %s210 = scalar_lea.vmem %s1, %s209
      %p211 = scmp.lt.s32.totalorder %s19, 1
      %s212 = scalar_select %p211, %s19, 1
      %s213 = smul.addr %s212, 2
      %s214 = scalar_lea.vmem %s2, %s213
      %p215 = scmp.lt.s32.totalorder %s18, 1
      %s216 = scalar_select %p215, %s18, 1
      %s217 = smul.addr %s216, 16
      %s218 = smul.addr %s217, 8
      %s219 = scalar_lea.vmem %s3, %s218
      %p221 = scmp.eq.s32.totalorder %s19, 0
      // Predicated region
      $region33: #{glu_forward.3} parent=31 // pred_check
        %p222 = pneg %p221
      $region34: #{glu_forward.3} parent=31 // pred_check_branch
        %224 = sbr.rel (%p222) target = $region36
      $region35: #{glu_forward.3} parent=31 // pred_region
        %225 = vst [vmem:[#allocation2] sm:$0xf] 0
        %226 = vst [vmem:[#allocation2 + $0x4] sm:$0xf] 0
        %v227 = vld [vmem:[%s205] sm:$0xf]
        %v228 = vld [vmem:[%s205 + $0x4] sm:$0xf]
        %229 = vst [vmem:[#allocation2 + $0x8] sm:$0xf] %v227
        %230 = vst [vmem:[#allocation2 + $0xc] sm:$0xf] %v228
        %231 = vst [vmem:[#allocation2 + $0x10] sm:$0xf] 0
        %232 = vst [vmem:[#allocation2 + $0x14] sm:$0xf] 0
      $region36: #{glu_forward.3} parent=31 // pred_fallthru
        _
      %v233 = vld [vmem:[#allocation2 + $0x4] sm:$0x8]
      %v234 = vld [vmem:[#allocation2 + $0x8] sm:$0xf]
      %v235 = vld [vmem:[#allocation2 + $0xc] sm:$0xf]
      %v236 = vld [vmem:[%s210] sm:$0xff]
      %v237 = vld [vmem:[%s210 + $0x8] sm:$0xff]
      %v238 = vld [vmem:[%s210 + $0x10] sm:$0xff]
      %v239 = vld [vmem:[%s210 + $0x18] sm:$0xff]
      %v240 = vld [vmem:[%s210 + $0x20] sm:$0xff]
      %v241 = vld [vmem:[%s210 + $0x28] sm:$0xff]
      %v242 = vld [vmem:[%s210 + $0x30] sm:$0xff]
      %v243 = vld [vmem:[%s210 + $0x38] sm:$0xff]
      %v244 = vld [vmem:[%s210 + $0x40] sm:$0xff]
      %v245 = vld [vmem:[%s210 + $0x48] sm:$0xff]
      %v246 = vld [vmem:[%s210 + $0x50] sm:$0xff]
      %v247 = vld [vmem:[%s210 + $0x58] sm:$0xff]
      %v248 = vld [vmem:[%s210 + $0x60] sm:$0xff]
      %v249 = vld [vmem:[%s210 + $0x68] sm:$0xff]
      %v250 = vld [vmem:[%s210 + $0x70] sm:$0xff]
      %v251 = vld [vmem:[%s210 + $0x78] sm:$0xff]
      %s252 = scalar_lea.vmem %s210, 128
      %v253 = vld [vmem:[%s252] sm:$0xff]
      %v254 = vld [vmem:[%s252 + $0x8] sm:$0xff]
      %v255 = vld [vmem:[%s252 + $0x10] sm:$0xff]
      %v256 = vld [vmem:[%s252 + $0x18] sm:$0xff]
      %v257 = vld [vmem:[%s252 + $0x20] sm:$0xff]
      %v258 = vld [vmem:[%s252 + $0x28] sm:$0xff]
      %v259 = vld [vmem:[%s252 + $0x30] sm:$0xff]
      %v260 = vld [vmem:[%s252 + $0x38] sm:$0xff]
      %v261 = vld [vmem:[%s252 + $0x40] sm:$0xff]
      %v262 = vld [vmem:[%s252 + $0x48] sm:$0xff]
      %v263 = vld [vmem:[%s252 + $0x50] sm:$0xff]
      %v264 = vld [vmem:[%s252 + $0x58] sm:$0xff]
      %v265 = vld [vmem:[%s252 + $0x60] sm:$0xff]
      %v266 = vld [vmem:[%s252 + $0x68] sm:$0xff]
      %v267 = vld [vmem:[%s252 + $0x70] sm:$0xff]
      %v268 = vld [vmem:[%s252 + $0x78] sm:$0xff]
      %v271 = vunpack.c.l.b16 %v234
      %v272 = vunpack.c.l.b16 %v235
      %v273 = vpack.c.b16 %v272, %v271
      %v291 = vunpack.c.l.b16 %v253
      %v292 = vunpack.c.h.b16 %v253
      %v293 = vunpack.c.l.b16 %v254
      %v294 = vunpack.c.h.b16 %v254
      %v295 = vunpack.c.l.b16 %v255
      %v296 = vunpack.c.h.b16 %v255
      %v297 = vunpack.c.l.b16 %v256
      %v298 = vunpack.c.h.b16 %v256
      %v299 = vunpack.c.l.b16 %v257
      %v300 = vunpack.c.h.b16 %v257
      %v301 = vunpack.c.l.b16 %v258
      %v302 = vunpack.c.h.b16 %v258
      %v303 = vunpack.c.l.b16 %v259
      %v304 = vunpack.c.h.b16 %v259
      %v305 = vunpack.c.l.b16 %v260
      %v306 = vunpack.c.h.b16 %v260
      %v307 = vunpack.c.l.b16 %v261
      %v308 = vunpack.c.h.b16 %v261
      %v309 = vunpack.c.l.b16 %v262
      %v310 = vunpack.c.h.b16 %v262
      %v311 = vunpack.c.l.b16 %v263
      %v312 = vunpack.c.h.b16 %v263
      %v313 = vunpack.c.l.b16 %v264
      %v314 = vunpack.c.h.b16 %v264
      %v315 = vunpack.c.l.b16 %v265
      %v316 = vunpack.c.h.b16 %v265
      %v317 = vunpack.c.l.b16 %v266
      %v318 = vunpack.c.h.b16 %v266
      %v319 = vunpack.c.l.b16 %v267
      %v320 = vunpack.c.h.b16 %v267
      %v321 = vunpack.c.l.b16 %v268
      %v322 = vunpack.c.h.b16 %v268
      %v323 = vpack.c.b16 %v293, %v291
      %v324 = vpack.c.b16 %v294, %v292
      %v325 = vpack.c.b16 %v297, %v295
      %v326 = vpack.c.b16 %v298, %v296
      %v327 = vpack.c.b16 %v301, %v299
      %v328 = vpack.c.b16 %v302, %v300
      %v329 = vpack.c.b16 %v305, %v303
      %v330 = vpack.c.b16 %v306, %v304
      %v331 = vpack.c.b16 %v309, %v307
      %v332 = vpack.c.b16 %v310, %v308
      %v333 = vpack.c.b16 %v313, %v311
      %v334 = vpack.c.b16 %v314, %v312
      %v335 = vpack.c.b16 %v317, %v315
      %v336 = vpack.c.b16 %v318, %v316
      %v337 = vpack.c.b16 %v321, %v319
      %v338 = vpack.c.b16 %v322, %v320
      %355 = vmatpush.bf16.msra.mxu0 %v337
      %356 = vmatpush.bf16.msra.mxu0 %v335
      %357 = vmatpush.bf16.msra.mxu0 %v333
      %358 = vmatpush.bf16.msra.mxu0 %v331
      %359 = vmatpush.bf16.msra.mxu0 %v329
      %360 = vmatpush.bf16.msra.mxu0 %v327
      %361 = vmatpush.bf16.msra.mxu0 %v325
      %362 = vmatpush.bf16.msra.mxu0 %v323
      %363 = vmatmul.bf16.gmra.mxu0 %v273
      %v364 = vpop.f32.mrf.mxu0
      %v365 = vadd.f32 0.0, %v364
      %v366 = vpop.f32.mrf.mxu0
      %v367 = vadd.f32 0.0, %v366
      %368 = vdwg.mxu0
      %369 = vmatpush.bf16.msra.mxu0 %v338
      %370 = vmatpush.bf16.msra.mxu0 %v336
      %371 = vmatpush.bf16.msra.mxu0 %v334
      %372 = vmatpush.bf16.msra.mxu0 %v332
      %373 = vmatpush.bf16.msra.mxu0 %v330
      %374 = vmatpush.bf16.msra.mxu0 %v328
      %375 = vmatpush.bf16.msra.mxu0 %v326
      %376 = vmatpush.bf16.msra.mxu0 %v324
      %377 = vmatmul.bf16.gmra.mxu0 %v273
      %v378 = vpop.f32.mrf.mxu0
      %v379 = vadd.f32 0.0, %v378
      %v380 = vpop.f32.mrf.mxu0
      %v381 = vadd.f32 0.0, %v380
      %382 = vdwg.mxu0
      %v384 = vunpack.c.l.b16 %v233
      %v385 = vpack.c.b16 %v271, %v384
      %v386 = vpack.c.b16 %v272, %v272
      %vm387 = vsmask.f32 4352
      %v389 = vshrl.u32 %v385, 16
      %v391 = vrot.slane %v389, 3
      %v392 = vshll.u32 %v385, 16
      %v394 = vrot.slane %v392, 4
      %v395 = vor.u32 %v391, %v394
      %v397 = vshrl.u32 %v386, 16
      %v399 = vrot.slane %v397, 3
      %v400 = vshll.u32 %v386, 16
      %v402 = vrot.slane %v400, 4
      %v403 = vor.u32 %v399, %v402
      %v404 = vsel %vm387, %v395, %v403
      %v422 = vunpack.c.l.b16 %v236
      %v423 = vunpack.c.h.b16 %v236
      %v424 = vunpack.c.l.b16 %v237
      %v425 = vunpack.c.h.b16 %v237
      %v426 = vunpack.c.l.b16 %v238
      %v427 = vunpack.c.h.b16 %v238
      %v428 = vunpack.c.l.b16 %v239
      %v429 = vunpack.c.h.b16 %v239
      %v430 = vunpack.c.l.b16 %v240
      %v431 = vunpack.c.h.b16 %v240
      %v432 = vunpack.c.l.b16 %v241
      %v433 = vunpack.c.h.b16 %v241
      %v434 = vunpack.c.l.b16 %v242
      %v435 = vunpack.c.h.b16 %v242
      %v436 = vunpack.c.l.b16 %v243
      %v437 = vunpack.c.h.b16 %v243
      %v438 = vunpack.c.l.b16 %v244
      %v439 = vunpack.c.h.b16 %v244
      %v440 = vunpack.c.l.b16 %v245
      %v441 = vunpack.c.h.b16 %v245
      %v442 = vunpack.c.l.b16 %v246
      %v443 = vunpack.c.h.b16 %v246
      %v444 = vunpack.c.l.b16 %v247
      %v445 = vunpack.c.h.b16 %v247
      %v446 = vunpack.c.l.b16 %v248
      %v447 = vunpack.c.h.b16 %v248
      %v448 = vunpack.c.l.b16 %v249
      %v449 = vunpack.c.h.b16 %v249
      %v450 = vunpack.c.l.b16 %v250
      %v451 = vunpack.c.h.b16 %v250
      %v452 = vunpack.c.l.b16 %v251
      %v453 = vunpack.c.h.b16 %v251
      %v454 = vpack.c.b16 %v424, %v422
      %v455 = vpack.c.b16 %v425, %v423
      %v456 = vpack.c.b16 %v428, %v426
      %v457 = vpack.c.b16 %v429, %v427
      %v458 = vpack.c.b16 %v432, %v430
      %v459 = vpack.c.b16 %v433, %v431
      %v460 = vpack.c.b16 %v436, %v434
      %v461 = vpack.c.b16 %v437, %v435
      %v462 = vpack.c.b16 %v440, %v438
      %v463 = vpack.c.b16 %v441, %v439
      %v464 = vpack.c.b16 %v444, %v442
      %v465 = vpack.c.b16 %v445, %v443
      %v466 = vpack.c.b16 %v448, %v446
      %v467 = vpack.c.b16 %v449, %v447
      %v468 = vpack.c.b16 %v452, %v450
      %v469 = vpack.c.b16 %v453, %v451
      %486 = vmatpush.bf16.msra.mxu0 %v468
      %487 = vmatpush.bf16.msra.mxu0 %v466
      %488 = vmatpush.bf16.msra.mxu0 %v464
      %489 = vmatpush.bf16.msra.mxu0 %v462
      %490 = vmatpush.bf16.msra.mxu0 %v460
      %491 = vmatpush.bf16.msra.mxu0 %v458
      %492 = vmatpush.bf16.msra.mxu0 %v456
      %493 = vmatpush.bf16.msra.mxu0 %v454
      %494 = vmatmul.bf16.gmra.mxu0 %v404
      %v495 = vpop.f32.mrf.mxu0
      %v496 = vadd.f32 %v365, %v495
      %v497 = vpop.f32.mrf.mxu0
      %v498 = vadd.f32 %v367, %v497
      %499 = vdwg.mxu0
      %500 = vmatpush.bf16.msra.mxu0 %v469
      %501 = vmatpush.bf16.msra.mxu0 %v467
      %502 = vmatpush.bf16.msra.mxu0 %v465
      %503 = vmatpush.bf16.msra.mxu0 %v463
      %504 = vmatpush.bf16.msra.mxu0 %v461
      %505 = vmatpush.bf16.msra.mxu0 %v459
      %506 = vmatpush.bf16.msra.mxu0 %v457
      %507 = vmatpush.bf16.msra.mxu0 %v455
      %508 = vmatmul.bf16.gmra.mxu0 %v404
      %v509 = vpop.f32.mrf.mxu0
      %v510 = vadd.f32 %v379, %v509
      %v511 = vpop.f32.mrf.mxu0
      %v512 = vadd.f32 %v381, %v511
      %513 = vdwg.mxu0
      %v514 = vld [vmem:[#allocation2 + $0x8] sm:$0xf]
      %v515 = vld [vmem:[#allocation2 + $0xc] sm:$0xf]
      %v516 = vld [vmem:[#allocation2 + $0x10] sm:$0x1]
      %s517 = scalar_lea.vmem %s210, 256
      %v518 = vld [vmem:[%s517] sm:$0xff]
      %v519 = vld [vmem:[%s517 + $0x8] sm:$0xff]
      %v520 = vld [vmem:[%s517 + $0x10] sm:$0xff]
      %v521 = vld [vmem:[%s517 + $0x18] sm:$0xff]
      %v522 = vld [vmem:[%s517 + $0x20] sm:$0xff]
      %v523 = vld [vmem:[%s517 + $0x28] sm:$0xff]
      %v524 = vld [vmem:[%s517 + $0x30] sm:$0xff]
      %v525 = vld [vmem:[%s517 + $0x38] sm:$0xff]
      %v526 = vld [vmem:[%s517 + $0x40] sm:$0xff]
      %v527 = vld [vmem:[%s517 + $0x48] sm:$0xff]
      %v528 = vld [vmem:[%s517 + $0x50] sm:$0xff]
      %v529 = vld [vmem:[%s517 + $0x58] sm:$0xff]
      %v530 = vld [vmem:[%s517 + $0x60] sm:$0xff]
      %v531 = vld [vmem:[%s517 + $0x68] sm:$0xff]
      %v532 = vld [vmem:[%s517 + $0x70] sm:$0xff]
      %v533 = vld [vmem:[%s517 + $0x78] sm:$0xff]
      %v537 = vunpack.c.l.b16 %v514
      %v538 = vunpack.c.l.b16 %v515
      %v539 = vunpack.c.l.b16 %v516
      %v540 = vpack.c.b16 %v538, %v537
      %v541 = vpack.c.b16 %v539, %v539
      %vm542 = vsmask.f32 7424
      %v544 = vshrl.u32 %v540, 16
      %v546 = vshll.u32 %v540, 16
      %v548 = vrot.slane %v546, 1
      %v549 = vor.u32 %v544, %v548
      %v551 = vshll.u32 %v541, 16
      %v553 = vrot.slane %v551, 1
      %v554 = vsel %vm542, %v549, %v553
      %v572 = vunpack.c.l.b16 %v518
      %v573 = vunpack.c.h.b16 %v518
      %v574 = vunpack.c.l.b16 %v519
      %v575 = vunpack.c.h.b16 %v519
      %v576 = vunpack.c.l.b16 %v520
      %v577 = vunpack.c.h.b16 %v520
      %v578 = vunpack.c.l.b16 %v521
      %v579 = vunpack.c.h.b16 %v521
      %v580 = vunpack.c.l.b16 %v522
      %v581 = vunpack.c.h.b16 %v522
      %v582 = vunpack.c.l.b16 %v523
      %v583 = vunpack.c.h.b16 %v523
      %v584 = vunpack.c.l.b16 %v524
      %v585 = vunpack.c.h.b16 %v524
      %v586 = vunpack.c.l.b16 %v525
      %v587 = vunpack.c.h.b16 %v525
      %v588 = vunpack.c.l.b16 %v526
      %v589 = vunpack.c.h.b16 %v526
      %v590 = vunpack.c.l.b16 %v527
      %v591 = vunpack.c.h.b16 %v527
      %v592 = vunpack.c.l.b16 %v528
      %v593 = vunpack.c.h.b16 %v528
      %v594 = vunpack.c.l.b16 %v529
      %v595 = vunpack.c.h.b16 %v529
      %v596 = vunpack.c.l.b16 %v530
      %v597 = vunpack.c.h.b16 %v530
      %v598 = vunpack.c.l.b16 %v531
      %v599 = vunpack.c.h.b16 %v531
      %v600 = vunpack.c.l.b16 %v532
      %v601 = vunpack.c.h.b16 %v532
      %v602 = vunpack.c.l.b16 %v533
      %v603 = vunpack.c.h.b16 %v533
      %v604 = vpack.c.b16 %v574, %v572
      %v605 = vpack.c.b16 %v575, %v573
      %v606 = vpack.c.b16 %v578, %v576
      %v607 = vpack.c.b16 %v579, %v577
      %v608 = vpack.c.b16 %v582, %v580
      %v609 = vpack.c.b16 %v583, %v581
      %v610 = vpack.c.b16 %v586, %v584
      %v611 = vpack.c.b16 %v587, %v585
      %v612 = vpack.c.b16 %v590, %v588
      %v613 = vpack.c.b16 %v591, %v589
      %v614 = vpack.c.b16 %v594, %v592
      %v615 = vpack.c.b16 %v595, %v593
      %v616 = vpack.c.b16 %v598, %v596
      %v617 = vpack.c.b16 %v599, %v597
      %v618 = vpack.c.b16 %v602, %v600
      %v619 = vpack.c.b16 %v603, %v601
      %636 = vmatpush.bf16.msra.mxu0 %v618
      %637 = vmatpush.bf16.msra.mxu0 %v616
      %638 = vmatpush.bf16.msra.mxu0 %v614
      %639 = vmatpush.bf16.msra.mxu0 %v612
      %640 = vmatpush.bf16.msra.mxu0 %v610
      %641 = vmatpush.bf16.msra.mxu0 %v608
      %642 = vmatpush.bf16.msra.mxu0 %v606
      %643 = vmatpush.bf16.msra.mxu0 %v604
      %644 = vmatmul.bf16.gmra.mxu0 %v554
      %v645 = vpop.f32.mrf.mxu0
      %v646 = vadd.f32 0.0, %v645
      %v647 = vpop.f32.mrf.mxu0
      %v648 = vadd.f32 0.0, %v647
      %649 = vdwg.mxu0
      %650 = vmatpush.bf16.msra.mxu0 %v619
      %651 = vmatpush.bf16.msra.mxu0 %v617
      %652 = vmatpush.bf16.msra.mxu0 %v615
      %653 = vmatpush.bf16.msra.mxu0 %v613
      %654 = vmatpush.bf16.msra.mxu0 %v611
      %655 = vmatpush.bf16.msra.mxu0 %v609
      %656 = vmatpush.bf16.msra.mxu0 %v607
      %657 = vmatpush.bf16.msra.mxu0 %v605
      %658 = vmatmul.bf16.gmra.mxu0 %v554
      %v659 = vpop.f32.mrf.mxu0
      %v660 = vadd.f32 0.0, %v659
      %v661 = vpop.f32.mrf.mxu0
      %v662 = vadd.f32 0.0, %v661
      %663 = vdwg.mxu0
      %v664 = vadd.f32 %v496, %v646
      %v665 = vadd.f32 %v510, %v660
      %v666 = vadd.f32 %v498, %v648
      %v667 = vadd.f32 %v512, %v662
      %v668 = vld [vmem:[%s214] sm:$0x3]
      %v670 = vperm.slane %v668, 0
      %v671 = vperm.slane %v668, 1
      %v674 = vadd.f32 %v664, %v670
      %v675 = vadd.f32 %v665, %v671
      %v676 = vadd.f32 %v666, %v670
      %v677 = vadd.f32 %v667, %v671
      %v678 = vmul.f32 %v675, 0.5
      %v679 = vmul.f32 %v677, 0.5
      %v680 = vtanh.pop %v678
      %v681 = vtanh.pop %v679
      %v682 = vmul.f32 %v680, 0.5
      %v683 = vmul.f32 %v681, 0.5
      %v684 = vadd.f32 %v682, 0.5
      %v685 = vadd.f32 %v683, 0.5
      %v686 = vunpack.c.l.bf16 %v234
      %v687 = vunpack.c.l.bf16 %v235
      %v688 = vmul.f32 %v674, %v684
      %v689 = vmul.f32 %v676, %v685
      %v690 = vadd.f32 %v686, %v688
      %v691 = vadd.f32 %v687, %v689
      %v692 = vmul.f32 %v690, 0.70710677
      %v693 = vmul.f32 %v691, 0.70710677
      %s694 = sadd.s32 %s19, 1
      %p695 = scmp.lt.s32.totalorder %s694, 2
      // Predicated region
      $region37: #{glu_forward.3} parent=31 // pred_check
        %p696 = pneg %p695
      $region38: #{glu_forward.3} parent=31 // pred_check_branch
        %698 = sbr.rel (%p696) target = $region40
      $region39: #{glu_forward.3} parent=31 // pred_region
        %v699 = vpack.c.bf16 %v692, %v692
        %v700 = vpack.c.bf16 %v693, %v693
        %701 = vst [vmem:[#allocation2 + $0x8] sm:$0xf] %v699
        %702 = vst [vmem:[#allocation2 + $0xc] sm:$0xf] %v700
      $region40: #{glu_forward.3} parent=31 // pred_fallthru
        _
      %p703 = scmp.eq.s32.totalorder %s694, 2
      // Predicated region
      $region41: #{glu_forward.3} parent=31 // pred_check
        %p704 = pneg %p703
      $region42: #{glu_forward.3} parent=31 // pred_check_branch
        %706 = sbr.rel (%p704) target = $region44
      $region43: #{glu_forward.3} parent=31 // pred_region
        %707 = vxpose.xlu0.b32.start [1/16] %v692, 128
        %708 = vxpose.xlu0.b32.cont [2/16] %v693, 128
        %709 = vxpose.xlu0.b32.cont [3/16] 0.0, 128
        %710 = vxpose.xlu0.b32.cont [4/16] 0.0, 128
        %711 = vxpose.xlu0.b32.cont [5/16] 0.0, 128
        %712 = vxpose.xlu0.b32.cont [6/16] 0.0, 128
        %713 = vxpose.xlu0.b32.cont [7/16] 0.0, 128
        %714 = vxpose.xlu0.b32.cont [8/16] 0.0, 128
        %715 = vxpose.xlu0.b32.cont [9/16] 0.0, 128
        %716 = vxpose.xlu0.b32.cont [10/16] 0.0, 128
        %717 = vxpose.xlu0.b32.cont [11/16] 0.0, 128
        %718 = vxpose.xlu0.b32.cont [12/16] 0.0, 128
        %719 = vxpose.xlu0.b32.cont [13/16] 0.0, 128
        %720 = vxpose.xlu0.b32.cont [14/16] 0.0, 128
        %721 = vxpose.xlu0.b32.cont [15/16] 0.0, 128
        %722 = vxpose.xlu0.b32.end [16/16] 0.0, 128
        %v723 = vpop.trf.xlu0
        %v724 = vpop.trf.xlu0
        %v725 = vpop.trf.xlu0
        %v726 = vpop.trf.xlu0
        %v727 = vpop.trf.xlu0
        %v728 = vpop.trf.xlu0
        %v729 = vpop.trf.xlu0
        %v730 = vpop.trf.xlu0
        %v731 = vpop.trf.xlu0
        %v732 = vpop.trf.xlu0
        %v733 = vpop.trf.xlu0
        %v734 = vpop.trf.xlu0
        %v735 = vpop.trf.xlu0
        %v736 = vpop.trf.xlu0
        %v737 = vpop.trf.xlu0
        %v738 = vpop.trf.xlu0
        %vm739 = vcmask 130048
        %740 = vst.msk [vmem:[%s219] sm:$0xff] %vm739, %v723
        %741 = vst.msk [vmem:[%s219 + $0x8] sm:$0xff] %vm739, %v724
        %742 = vst.msk [vmem:[%s219 + $0x10] sm:$0xff] %vm739, %v725
        %743 = vst.msk [vmem:[%s219 + $0x18] sm:$0xff] %vm739, %v726
        %744 = vst.msk [vmem:[%s219 + $0x20] sm:$0xff] %vm739, %v727
        %745 = vst.msk [vmem:[%s219 + $0x28] sm:$0xff] %vm739, %v728
        %746 = vst.msk [vmem:[%s219 + $0x30] sm:$0xff] %vm739, %v729
        %747 = vst.msk [vmem:[%s219 + $0x38] sm:$0xff] %vm739, %v730
        %748 = vst.msk [vmem:[%s219 + $0x40] sm:$0xff] %vm739, %v731
        %749 = vst.msk [vmem:[%s219 + $0x48] sm:$0xff] %vm739, %v732
        %750 = vst.msk [vmem:[%s219 + $0x50] sm:$0xff] %vm739, %v733
        %751 = vst.msk [vmem:[%s219 + $0x58] sm:$0xff] %vm739, %v734
        %752 = vst.msk [vmem:[%s219 + $0x60] sm:$0xff] %vm739, %v735
        %753 = vst.msk [vmem:[%s219 + $0x68] sm:$0xff] %vm739, %v736
        %754 = vst.msk [vmem:[%s219 + $0x70] sm:$0xff] %vm739, %v737
        %755 = vst.msk [vmem:[%s219 + $0x78] sm:$0xff] %vm739, %v738
      $region44: #{glu_forward.3} parent=31 // pred_fallthru
        _
      %p756 = scmp.lt.s32.totalorder %s18, 1
      %s757 = scalar_select %p756, %s18, 1
      %s758 = smul.addr %s757, 16
      %s759 = smul.addr %s758, 8
      %s760 = scalar_lea.vmem %s3, %s759
      // Predicated region
      $region45: #{glu_forward.3} parent=31 // pred_check
        %p761 = pneg %p122
      $region46: #{glu_forward.3} parent=31 // pred_check_branch
        %763 = sbr.rel (%p761) target = $region48
      $region47: #{glu_forward.3} parent=31 // pred_region
        _
      $region48: #{glu_forward.3} parent=31 // pred_fallthru
        _
    $region32: #{glu_forward.3} parent=5 // pred_fallthru
      _
    %p764 = scmp.le.s32.totalorder 2, %s9
    // Predicated region
    $region49: #{glu_forward.3} parent=5 // pred_check
      %p765 = pneg %p764
    $region50: #{glu_forward.3} parent=5 // pred_check_branch
      %767 = sbr.rel (%p765) target = $region52
    $region51: #{glu_forward.3} parent=5 // pred_region
      %s768 = ssub.s32 %s9, 2
      // Predicated region
      $region53: #{glu_forward.3} parent=51 // pred_check
        %p769 = pneg %p128
      $region54: #{glu_forward.3} parent=51 // pred_check_branch
        %771 = sbr.rel (%p769) target = $region56
      $region55: #{glu_forward.3} parent=51 // pred_region
        %p772 = scmp.lt.s32.totalorder %s20, 1
        %s773 = scalar_select %p772, %s20, 1
        %s774 = smul.addr %s773, 16
        %s775 = smul.addr %s774, 8
        %s776 = scalar_lea.vmem %s3, %s775
      $region56: #{glu_forward.3} parent=51 // pred_fallthru
        _
    $region52: #{glu_forward.3} parent=5 // pred_fallthru
      _
  $region6: #{glu_forward.3} parent=0 // loop_footer
    %s13 = sadd.s32 1, %s9
  $region7: #{glu_forward.3} parent=0 // loop_footer_branch
    %8 = sbr.rel target = $region3
  $region8: #{glu_forward.3} parent=0 // loop_exit
    _

</llo_original>
